<compile_context>
chip_gen: v7x
topology: tpu7x:2x2x1
jax: 0.10.0
libtpu: 0.0.40
codegen_flags: <defaults>
</compile_context>

<pallas_src>
import math

import jax
import jax.numpy as jnp
from jax.experimental import pallas as pl
from jax.experimental.pallas import tpu as pltpu

_CP = 128  # padded class width: layer-2 matmul result and store are full-lane


def _mlp_kernel(x_ref, w1_ref, b1_ref, w2_ref, b2_ref, out_ref):
    # In-kernel bf16 cast of the streamed activations (VALU slots are idle here).
    x_bf = x_ref[...].astype(jnp.bfloat16)

    # Layer 1: Linear (bf16 MXU operands, f32 accumulation) + bias + ReLU (f32 VPU).
    h = jnp.dot(x_bf, w1_ref[...], preferred_element_type=jnp.float32)
    h = jnp.maximum(h + b1_ref[...], 0.0)
    # Dropout: inference-mode identity (PyTorch nn.Dropout in eval()).
    # TODO(synk): training-mode dropout (pltpu.prng_seed/prng_random_bits mask) not emitted.

    # Layer 2: Linear against lane-padded (H2, 128) weights -> (TB, 128) tile.
    logits = jnp.dot(h.astype(jnp.bfloat16), w2_ref[...],
                     preferred_element_type=jnp.float32)
    # Single lane-dense, unmasked f32 store; real classes live in lanes [0, C).
    out_ref[...] = logits + b2_ref[...]


def _choose_tb(B):
    """Batch tile: multiple of 16, <=512 rows, >=2 (ideally ~4) grid steps."""
    b16 = ((B + 15) // 16) * 16
    if b16 <= 32:
        return b16                      # tiny batch: a single small tile
    if b16 <= 2048:
        tb = ((b16 + 3) // 4 + 15) // 16 * 16   # aim for ~4 pipelined steps
        return max(32, tb)
    return 512                           # large batch: 512-row tiles, many steps


@jax.jit
def mlp_forward_pallas(x, w1, b1, w2, b2):
    B, H1 = x.shape
    H2 = w1.shape[1]
    C = w2.shape[1]

    TB = _choose_tb(B)
    B_pad = pl.cdiv(B, TB) * TB
    if B_pad != B:
        x = jnp.pad(x, ((0, B_pad - B), (0, 0)))

    # Weights as bf16 MXU operands (tiny, VMEM-resident); biases stay f32 and
    # are added after f32 accumulation.
    w1_bf = w1.astype(jnp.bfloat16)
    b1_r = b1.reshape(1, H2).astype(jnp.float32)
    # Zero-pad the C(=2)-wide layer-2 weights/bias to 128 lanes.
    w2_p = jnp.zeros((H2, _CP), jnp.bfloat16).at[:, :C].set(w2.astype(jnp.bfloat16))
    b2_p = jnp.zeros((1, _CP), jnp.float32).at[:, :C].set(
        b2.reshape(1, C).astype(jnp.float32))

    # NOTE(v5e): if writeback ever shows as the bottleneck there, a narrow
    # contiguous (B_pad, 8) output (masked vst, dense DMA) cuts write bytes 16x.
    logits_pad = pl.pallas_call(
        _mlp_kernel,
        out_shape=jax.ShapeDtypeStruct((B_pad, _CP), jnp.float32),
        grid=(B_pad // TB,),
        in_specs=[
            pl.BlockSpec((TB, H1), lambda i: (i, 0)),    # activations: streamed f32
            pl.BlockSpec((H1, H2), lambda i: (0, 0)),    # weights: VMEM-resident
            pl.BlockSpec((1, H2), lambda i: (0, 0)),
            pl.BlockSpec((H2, _CP), lambda i: (0, 0)),
            pl.BlockSpec((1, _CP), lambda i: (0, 0)),
        ],
        out_specs=pl.BlockSpec((TB, _CP), lambda i: (i, 0)),
        compiler_params=pltpu.CompilerParams(
            dimension_semantics=("parallel",)),
    )(x, w1_bf, b1_r, w2_p, b2_p)

    logits = logits_pad[:B, :C]
    probs = jax.nn.sigmoid(logits)       # tiny (B, 2) op; cheaper than 128 dead lanes
    return logits, probs


def focal_loss(logits, labels, alpha, gamma):
    """Matches the PyTorch forward: (weighted) cross_entropy -> focal modulation
    applied to the already-reduced loss (pt = exp(-ce)), as in the original module."""
    logp = jax.nn.log_softmax(
        logits.reshape(-1, logits.shape[-1]).astype(jnp.float32), axis=-1)
    labels = labels.reshape(-1)
    nll = -jnp.take_along_axis(logp, labels[:, None], axis=-1)[:, 0]
    if alpha is not None:
        class_w = jnp.array([alpha, 1.0 - alpha], dtype=jnp.float32)
        w = class_w[labels]
        ce = jnp.sum(w * nll) / jnp.sum(w)   # PyTorch weighted-mean reduction
    else:
        ce = jnp.mean(nll)
    pt = jnp.exp(-ce)
    return (1.0 - pt) ** gamma * ce


def init_linear_params(key, fan_in, fan_out):
    """Deterministic init mimicking nn.Linear default (uniform +/- 1/sqrt(fan_in))."""
    kw, kb = jax.random.split(key)
    bound = 1.0 / math.sqrt(fan_in)
    # stored as (in, out): transpose of PyTorch's (out, in)
    w = jax.random.uniform(kw, (fan_in, fan_out), jnp.float32, -bound, bound)
    b = jax.random.uniform(kb, (1, fan_out), jnp.float32, -bound, bound)
    return w, b


if __name__ == "__main__":
    # Module hyperparameters
    hidden_size1 = 32
    hidden_size2 = 32
    output_dim = 2          # num_classes (loss path asserts == 2)
    gamma = 2.0
    alpha = 0.25
    batch = 8

    key = jax.random.PRNGKey(0)
    kx, k1, k2, kl = jax.random.split(key, 4)

    x = jax.random.normal(kx, (batch, hidden_size1), jnp.float32)
    labels = jax.random.randint(kl, (batch,), 0, output_dim, jnp.int32)

    w1, b1 = init_linear_params(k1, hidden_size1, hidden_size2)
    w2, b2 = init_linear_params(k2, hidden_size2, output_dim)

    logits, probs = mlp_forward_pallas(x, w1, b1, w2, b2)
    loss = focal_loss(logits, labels, alpha, gamma)
    jax.block_until_ready((loss, logits, probs))

    # Reference 1: same bf16-operand / f32-accumulate math in plain JAX (tight check).
    h_bf = jnp.maximum(
        jnp.dot(x.astype(jnp.bfloat16), w1.astype(jnp.bfloat16),
                preferred_element_type=jnp.float32) + b1, 0.0)
    logits_bf = jnp.dot(h_bf.astype(jnp.bfloat16), w2.astype(jnp.bfloat16),
                        preferred_element_type=jnp.float32) + b2
    probs_bf = jax.nn.sigmoid(logits_bf)
    assert jnp.allclose(probs, probs_bf, atol=1e-3), "mismatch vs bf16 reference"

    # Reference 2: full-f32 forward (loose check — bf16 MXU operands).
    h_f32 = jnp.maximum(x @ w1 + b1, 0.0)
    probs_f32 = jax.nn.sigmoid(h_f32 @ w2 + b2)
    assert jnp.allclose(probs, probs_f32, atol=2e-2), "mismatch vs f32 reference"

    # Sanity-check a larger, multi-step-grid batch as well (exercises TB logic).
    xl = jax.random.normal(kx, (300, hidden_size1), jnp.float32)
    logits_l, probs_l = mlp_forward_pallas(xl, w1, b1, w2, b2)
    jax.block_until_ready(probs_l)
    probs_l_ref = jax.nn.sigmoid(jnp.maximum(xl @ w1 + b1, 0.0) @ w2 + b2)
    assert jnp.allclose(probs_l, probs_l_ref, atol=2e-2), "mismatch (large batch)"

    assert probs.shape == (batch, output_dim)
    assert logits.shape == (batch, output_dim)
    assert loss.shape == ()

    print("KERNEL_OK")
</pallas_src>

<mosaic_0001>
module attributes {stable_mosaic.version = 11 : i64} {
  func.func @_mlp_kernel(%arg0: i32, %arg1: memref<16x32xf32, #tpu.memory_space<vmem>>, %arg2: memref<32x32xbf16, #tpu.memory_space<vmem>>, %arg3: memref<1x32xf32, #tpu.memory_space<vmem>>, %arg4: memref<32x128xbf16, #tpu.memory_space<vmem>>, %arg5: memref<1x128xf32, #tpu.memory_space<vmem>>, %arg6: memref<16x128xf32, #tpu.memory_space<vmem>>) attributes {dimension_semantics = [#tpu.dimension_semantics<parallel>], iteration_bounds = array<i64: 1>, scalar_prefetch = 0 : i64, scratch_operands = 0 : i64, tpu.core_type = #tpu.core_type<tc>, window_params = [{transform_indices = @transform_0, window_bounds = array<i64: 16, 32>}, {pipeline_mode = #tpu.pipeline_mode<synchronous>, transform_indices = @transform_1, window_bounds = array<i64: 32, 32>}, {pipeline_mode = #tpu.pipeline_mode<synchronous>, transform_indices = @transform_2, window_bounds = array<i64: 1, 32>}, {pipeline_mode = #tpu.pipeline_mode<synchronous>, transform_indices = @transform_3, window_bounds = array<i64: 32, 128>}, {pipeline_mode = #tpu.pipeline_mode<synchronous>, transform_indices = @transform_4, window_bounds = array<i64: 1, 128>}, {transform_indices = @transform_5, window_bounds = array<i64: 16, 128>}]} {
    %c0 = arith.constant 0 : index
    %c0_0 = arith.constant 0 : index
    %0 = vector.load %arg1[%c0, %c0_0] : memref<16x32xf32, #tpu.memory_space<vmem>>, vector<16x32xf32>
    %1 = arith.truncf %0 : vector<16x32xf32> to vector<16x32xbf16>
    %c0_1 = arith.constant 0 : index
    %c0_2 = arith.constant 0 : index
    %2 = vector.load %arg2[%c0_1, %c0_2] : memref<32x32xbf16, #tpu.memory_space<vmem>>, vector<32x32xbf16>
    %cst = arith.constant dense<0.000000e+00> : vector<16x32xf32>
    %3 = tpu.matmul %1, %2, %cst {dimension_numbers = #tpu.dot_dimension_numbers<[1], [0], [0], [1], [0, 0, 1, 1], [], []>} : vector<16x32xbf16>, vector<32x32xbf16>, vector<16x32xf32> -> vector<16x32xf32>
    %c0_3 = arith.constant 0 : index
    %c0_4 = arith.constant 0 : index
    %4 = vector.load %arg3[%c0_3, %c0_4] : memref<1x32xf32, #tpu.memory_space<vmem>>, vector<1x32xf32>
    %5 = vector.broadcast %4 : vector<1x32xf32> to vector<16x32xf32>
    %6 = arith.addf %3, %5 : vector<16x32xf32>
    %cst_5 = arith.constant 0.000000e+00 : f32
    %7 = vector.broadcast %cst_5 : f32 to vector<16x32xf32>
    %8 = arith.maximumf %6, %7 : vector<16x32xf32>
    %9 = arith.truncf %8 : vector<16x32xf32> to vector<16x32xbf16>
    %c0_6 = arith.constant 0 : index
    %c0_7 = arith.constant 0 : index
    %10 = vector.load %arg4[%c0_6, %c0_7] : memref<32x128xbf16, #tpu.memory_space<vmem>>, vector<32x128xbf16>
    %cst_8 = arith.constant dense<0.000000e+00> : vector<16x128xf32>
    %11 = tpu.matmul %9, %10, %cst_8 {dimension_numbers = #tpu.dot_dimension_numbers<[1], [0], [0], [1], [0, 0, 1, 1], [], []>} : vector<16x32xbf16>, vector<32x128xbf16>, vector<16x128xf32> -> vector<16x128xf32>
    %c0_9 = arith.constant 0 : index
    %c0_10 = arith.constant 0 : index
    %12 = vector.load %arg5[%c0_9, %c0_10] : memref<1x128xf32, #tpu.memory_space<vmem>>, vector<1x128xf32>
    %13 = vector.broadcast %12 : vector<1x128xf32> to vector<16x128xf32>
    %14 = arith.addf %11, %13 : vector<16x128xf32>
    %c0_11 = arith.constant 0 : index
    %c0_12 = arith.constant 0 : index
    %15 = vector.load %arg6[%c0_11, %c0_12] : memref<16x128xf32, #tpu.memory_space<vmem>>, vector<16x128xf32>
    tpu.vector_store %arg6[%c0_11, %c0_12], %14 {strides = array<i32>} : memref<16x128xf32, #tpu.memory_space<vmem>>, vector<16x128xf32>,
    return
  }
  func.func @transform_0(%arg0: i32) -> (i32, i32) {
    %c0_i32 = arith.constant 0 : i32
    %c0_i32_0 = arith.constant 0 : i32
    return %arg0, %c0_i32 : i32, i32
  }
  func.func @transform_1(%arg0: i32) -> (i32, i32) {
    %c0_i32 = arith.constant 0 : i32
    %c0_i32_0 = arith.constant 0 : i32
    %c0_i32_1 = arith.constant 0 : i32
    return %c0_i32, %c0_i32_0 : i32, i32
  }
  func.func @transform_2(%arg0: i32) -> (i32, i32) {
    %c0_i32 = arith.constant 0 : i32
    %c0_i32_0 = arith.constant 0 : i32
    %c0_i32_1 = arith.constant 0 : i32
    return %c0_i32, %c0_i32_0 : i32, i32
  }
  func.func @transform_3(%arg0: i32) -> (i32, i32) {
    %c0_i32 = arith.constant 0 : i32
    %c0_i32_0 = arith.constant 0 : i32
    %c0_i32_1 = arith.constant 0 : i32
    return %c0_i32, %c0_i32_0 : i32, i32
  }
  func.func @transform_4(%arg0: i32) -> (i32, i32) {
    %c0_i32 = arith.constant 0 : i32
    %c0_i32_0 = arith.constant 0 : i32
    %c0_i32_1 = arith.constant 0 : i32
    return %c0_i32, %c0_i32_0 : i32, i32
  }
  func.func @transform_5(%arg0: i32) -> (i32, i32) {
    %c0_i32 = arith.constant 0 : i32
    %c0_i32_0 = arith.constant 0 : i32
    return %arg0, %c0_i32 : i32, i32
  }
}

</mosaic_0001>

<llo_original>
// kernel: mlp_forward_pallas.1
$region0: #{mlp_forward_pallas.1}
  #allocation0 [shape = 'u32[]', space=smem, size = 0x4, offset = 0x4, fixed_abs, tag = 'smem constant byte address 0x4 - core index']
  #allocation1 [shape = 'u32[144,128]{1,0:T(1,128)}', space=vmem, size = 0x12000, scoped, tag = 'internal scratch']
  %s0 = inlined_call_operand.vmem [shape: f32[16,32], index: 0, kind: input, shape index: {}]
  %s1 = inlined_call_operand.vmem [shape: bf16[32,32], index: 1, kind: input, shape index: {}]
  %s2 = inlined_call_operand.vmem [shape: f32[1,32], index: 2, kind: input, shape index: {}]
  %s3 = inlined_call_operand.vmem [shape: bf16[32,128], index: 3, kind: input, shape index: {}]
  %s4 = inlined_call_operand.vmem [shape: f32[1,128], index: 4, kind: input, shape index: {}]
  %s5 = inlined_call_operand.vmem [shape: f32[16,128], index: 5, kind: output, shape index: {}]
  %s6 = sld [smem:[#allocation0]]
  $region30: #{mlp_forward_pallas.1} parent=0
    _
  %s8 = ssub.s32 1, %s6
  %s9 = scalar_select 0, %s8, %s6
  // Predicated region
  $region2: #{mlp_forward_pallas.1} parent=0 // pred_check
    _
  $region3: #{mlp_forward_pallas.1} parent=0 // pred_check_branch
    %11 = sbr.rel (0) target = $region5
  $region4: #{mlp_forward_pallas.1} parent=0 // pred_region
    _
  $region5: #{mlp_forward_pallas.1} parent=0 // pred_fallthru
    _
  // Predicated region
  $region6: #{mlp_forward_pallas.1} parent=0 // pred_check
    _
  $region7: #{mlp_forward_pallas.1} parent=0 // pred_check_branch
    %13 = sbr.rel (0) target = $region9
  $region8: #{mlp_forward_pallas.1} parent=0 // pred_region
    _
  $region9: #{mlp_forward_pallas.1} parent=0 // pred_fallthru
    _
  // Predicated region
  $region10: #{mlp_forward_pallas.1} parent=0 // pred_check
    _
  $region11: #{mlp_forward_pallas.1} parent=0 // pred_check_branch
    %15 = sbr.rel (0) target = $region13
  $region12: #{mlp_forward_pallas.1} parent=0 // pred_region
    _
  $region13: #{mlp_forward_pallas.1} parent=0 // pred_fallthru
    _
  // Predicated region
  $region14: #{mlp_forward_pallas.1} parent=0 // pred_check
    _
  $region15: #{mlp_forward_pallas.1} parent=0 // pred_check_branch
    %17 = sbr.rel (0) target = $region17
  $region16: #{mlp_forward_pallas.1} parent=0 // pred_region
    _
  $region17: #{mlp_forward_pallas.1} parent=0 // pred_fallthru
    _
  // Predicated region
  $region18: #{mlp_forward_pallas.1} parent=0 // pred_check
    _
  $region19: #{mlp_forward_pallas.1} parent=0 // pred_check_branch
    %19 = sbr.rel (0) target = $region21
  $region20: #{mlp_forward_pallas.1} parent=0 // pred_region
    _
  $region21: #{mlp_forward_pallas.1} parent=0 // pred_fallthru
    _
  %v21 = vld [vmem:[%s0] sm:$0xff]
  %v22 = vld [vmem:[%s0 + $0x8] sm:$0xff]
  %v23 = vpack.c.bf16 %v22, %v21
  %v24 = vld [vmem:[%s1] sm:$0xf]
  %v25 = vld [vmem:[%s1 + $0x4] sm:$0xf]
  %v26 = vld [vmem:[%s1 + $0x8] sm:$0xf]
  %v27 = vld [vmem:[%s1 + $0xc] sm:$0xf]
  %v28 = vld [vmem:[%s2] sm:$0x1]
  %v30 = vlaneseq
  %v31 = vshrl.u32 %v30, 7
  %v32 = vsub.s32 0, %v31
  %v33 = vrot.slane %v28, %v32
  %v39 = vunpack.c.l.b16 %v24
  %v40 = vunpack.c.l.b16 %v25
  %v41 = vunpack.c.l.b16 %v26
  %v42 = vunpack.c.l.b16 %v27
  %v43 = vpack.c.b16 %v40, %v39
  %v44 = vpack.c.b16 %v42, %v41
  %vm47 = vcmask 261120
  %v49 = vsel %vm47, %v23, 0
  %51 = vmatprep.subr.bf16.mxu0 0
  %52 = vmatpush1.bf16.msra.mxu0 %v43
  %53 = vmatprep.subr.bf16.mxu0 0
  %54 = vmatpush1.bf16.msra.mxu0 %v44
  %55 = vmatprep.subr.bf16.mxu0 0
  %56 = vmatpush1.bf16.msra.mxu0 0
  %57 = vmatprep.subr.bf16.mxu0 0
  %58 = vmatpush1.bf16.msra.mxu0 0
  %59 = vmatprep.subr.bf16.mxu0 0
  %60 = vmatpush1.bf16.msra.mxu0 0
  %61 = vmatprep.subr.bf16.mxu0 0
  %62 = vmatpush1.bf16.msra.mxu0 0
  %63 = vmatprep.subr.bf16.mxu0 0
  %64 = vmatpush1.bf16.msra.mxu0 0
  %65 = vmatprep.subr.bf16.mxu0 0
  %66 = vmatpush1.bf16.msra.mxu0 0
  %67 = vmatprep.subr.bf16.mxu0 0
  %68 = vmatpush1.bf16.msra.mxu0 0
  %69 = vmatprep.subr.bf16.mxu0 0
  %70 = vmatpush1.bf16.msra.mxu0 0
  %71 = vmatprep.subr.bf16.mxu0 0
  %72 = vmatpush1.bf16.msra.mxu0 0
  %73 = vmatprep.subr.bf16.mxu0 0
  %74 = vmatpush1.bf16.msra.mxu0 0
  %75 = vmatprep.subr.bf16.mxu0 0
  %76 = vmatpush1.bf16.msra.mxu0 0
  %77 = vmatprep.subr.bf16.mxu0 0
  %78 = vmatpush1.bf16.msra.mxu0 0
  %79 = vmatprep.subr.bf16.mxu0 0
  %80 = vmatpush1.bf16.msra.mxu0 0
  %81 = vmatprep.subr.bf16.mxu0 0
  %82 = vmatpush1.bf16.msra.mxu0 0
  %83 = vmatprep.mubr.bf16.mxu0 0
  %84 = vmatmul.mubr.bf16.gmra.mrb[0].mxu0 %v49
  %v85 = vpop.f32.mrb[0].mxu0
  %v86 = vadd.f32 %v33, %v85
  %v87 = vpop.f32.mrb[0].mxu0
  %v88 = vpop.f32.mrb[0].mxu0
  %v89 = vadd.f32 %v33, %v88
  %v90 = vpop.f32.mrb[0].mxu0
  %91 = vdwg.mxu0
  %v92 = vmax.f32 %v86, 0.0
  %v93 = vmax.f32 %v89, 0.0
  %v94 = vpack.c.bf16 %v93, %v92
  %v95 = vld [vmem:[%s3] sm:$0xf]
  %v96 = vld [vmem:[%s3 + $0x4] sm:$0xf]
  %v97 = vld [vmem:[%s3 + $0x8] sm:$0xf]
  %v98 = vld [vmem:[%s3 + $0xc] sm:$0xf]
  %v99 = vld [vmem:[%s4] sm:$0x1]
  %v101 = vlaneseq
  %v102 = vshrl.u32 %v101, 7
  %v103 = vsub.s32 0, %v102
  %v104 = vrot.slane %v99, %v103
  %v110 = vunpack.c.l.b16 %v95
  %v111 = vunpack.c.l.b16 %v96
  %v112 = vunpack.c.l.b16 %v97
  %v113 = vunpack.c.l.b16 %v98
  %v114 = vpack.c.b16 %v111, %v110
  %v115 = vpack.c.b16 %v113, %v112
  %v119 = vsel %vm47, %v94, 0
  %121 = vmatprep.subr.bf16.mxu0 0
  %122 = vmatpush1.bf16.msra.mxu0 %v114
  %123 = vmatprep.subr.bf16.mxu0 0
  %124 = vmatpush1.bf16.msra.mxu0 %v115
  %125 = vmatprep.subr.bf16.mxu0 0
  %126 = vmatpush1.bf16.msra.mxu0 0
  %127 = vmatprep.subr.bf16.mxu0 0
  %128 = vmatpush1.bf16.msra.mxu0 0
  %129 = vmatprep.subr.bf16.mxu0 0
  %130 = vmatpush1.bf16.msra.mxu0 0
  %131 = vmatprep.subr.bf16.mxu0 0
  %132 = vmatpush1.bf16.msra.mxu0 0
  %133 = vmatprep.subr.bf16.mxu0 0
  %134 = vmatpush1.bf16.msra.mxu0 0
  %135 = vmatprep.subr.bf16.mxu0 0
  %136 = vmatpush1.bf16.msra.mxu0 0
  %137 = vmatprep.subr.bf16.mxu0 0
  %138 = vmatpush1.bf16.msra.mxu0 0
  %139 = vmatprep.subr.bf16.mxu0 0
  %140 = vmatpush1.bf16.msra.mxu0 0
  %141 = vmatprep.subr.bf16.mxu0 0
  %142 = vmatpush1.bf16.msra.mxu0 0
  %143 = vmatprep.subr.bf16.mxu0 0
  %144 = vmatpush1.bf16.msra.mxu0 0
  %145 = vmatprep.subr.bf16.mxu0 0
  %146 = vmatpush1.bf16.msra.mxu0 0
  %147 = vmatprep.subr.bf16.mxu0 0
  %148 = vmatpush1.bf16.msra.mxu0 0
  %149 = vmatprep.subr.bf16.mxu0 0
  %150 = vmatpush1.bf16.msra.mxu0 0
  %151 = vmatprep.subr.bf16.mxu0 0
  %152 = vmatpush1.bf16.msra.mxu0 0
  %153 = vmatprep.mubr.bf16.mxu0 0
  %154 = vmatmul.mubr.bf16.gmra.mrb[0].mxu0 %v119
  %v155 = vpop.f32.mrb[0].mxu0
  %v156 = vadd.f32 %v104, %v155
  %v157 = vpop.f32.mrb[0].mxu0
  %v158 = vpop.f32.mrb[0].mxu0
  %v159 = vadd.f32 %v104, %v158
  %v160 = vpop.f32.mrb[0].mxu0
  %161 = vdwg.mxu0
  %162 = vst [vmem:[%s5] sm:$0xff] %v156
  %163 = vst [vmem:[%s5 + $0x8] sm:$0xff] %v159
  // Predicated region
  $region22: #{mlp_forward_pallas.1} parent=0 // pred_check
    _
  $region23: #{mlp_forward_pallas.1} parent=0 // pred_check_branch
    %165 = sbr.rel (0) target = $region25
  $region24: #{mlp_forward_pallas.1} parent=0 // pred_region
    _
  $region25: #{mlp_forward_pallas.1} parent=0 // pred_fallthru
    _
  // Predicated region
  $region26: #{mlp_forward_pallas.1} parent=0 // pred_check
    _
  $region27: #{mlp_forward_pallas.1} parent=0 // pred_check_branch
    %167 = sbr.rel (0) target = $region29
  $region28: #{mlp_forward_pallas.1} parent=0 // pred_region
    _
  $region29: #{mlp_forward_pallas.1} parent=0 // pred_fallthru
    _

</llo_original>
